<compile_context>
chip_gen: v6e
topology: v6e:2x2x1
jax: 0.10.0
libtpu: 0.0.40
codegen_flags: <defaults>
</compile_context>

<pallas_src>
import jax
import jax.numpy as jnp
from jax.experimental import pallas as pl
from jax.experimental.pallas import tpu as pltpu


def _round_up(x, m):
    return (x + m - 1) // m * m


def _choose_row_tiling(m_rows, tm_cap=256):
    """>=2 row tiles (feeds both v7x TensorCores), each a multiple of 8 rows."""
    half = (m_rows + 1) // 2
    tm = min(tm_cap, max(8, _round_up(half, 8)))
    num_tiles = max(1, -(-m_rows // tm))
    return tm, num_tiles


def _resnet_kernel(xp_ref, w_ref, b_ref, o_ref):
    # xp_ref: (M_total + 2, Wp)  flattened zero-padded image rows (VMEM resident)
    # w_ref:  (3, Wp, No)        banded conv weights per ky tap (+identity residual)
    # b_ref:  (1, No)            bias tiled across W, zero-padded to No lanes
    # o_ref:  (TM, No)           output row tile = conv(x) + x + bias (padded lanes)
    tm = o_ref.shape[0]
    # Base row is 8-aligned (TM % 8 == 0); taps 1/2 are deliberately just +1/+2.
    row0 = pl.multiple_of(pl.program_id(0) * tm, 8)

    # Three ky-tap matmuls kept back-to-back (no intervening VPU ops) so v7x can
    # accumulate in place in the MRB; bias is added once after the last dot.
    acc = jnp.dot(xp_ref[pl.ds(row0, tm), :], w_ref[0],
                  preferred_element_type=jnp.float32)
    acc = acc + jnp.dot(xp_ref[pl.ds(row0 + 1, tm), :], w_ref[1],
                        preferred_element_type=jnp.float32)
    acc = acc + jnp.dot(xp_ref[pl.ds(row0 + 2, tm), :], w_ref[2],
                        preferred_element_type=jnp.float32)

    o_ref[...] = (acc + b_ref[...]).astype(o_ref.dtype)


def _banded_weights(weight, width, n_out):
    """Fold 3x3xCinxCout conv weights into 3 banded ((W+2)*C, n_out) matrices.

    wb[ky, (w+kx)*C + ci, w*C + co] = weight[co, ci, ky, kx]; output columns beyond
    W*C are zero padding (lane-dense output).
    """
    c = weight.shape[0]
    w_t = jnp.transpose(weight, (2, 3, 1, 0))             # (3, 3, Cin, Cout)
    wp_idx = jnp.arange(width + 2)[:, None]                # padded col index
    w_idx = jnp.arange(width)[None, :]                     # output col index
    kx = wp_idx - w_idx                                    # (W+2, W)
    valid = (kx >= 0) & (kx < 3)
    taps = w_t[:, jnp.clip(kx, 0, 2)]                      # (3, W+2, W, Cin, Cout)
    taps = jnp.where(valid[None, :, :, None, None], taps, 0.0)
    wb = jnp.transpose(taps, (0, 1, 3, 2, 4)).reshape(3, (width + 2) * c, width * c)
    if n_out > width * c:
        wb = jnp.pad(wb, ((0, 0), (0, 0), (0, n_out - width * c)))
    return wb


def prepare_resnet_params(weight, bias, width):
    """Per-layer, one-time prep: fold residual identity into the centre tap, band the
    weights, tile + lane-pad the bias.  Do NOT call this per forward pass."""
    c = weight.shape[0]
    wo = width * c
    n_out = _round_up(max(wo, 128), 128)                   # lane-dense output width
    w_eff = weight.astype(jnp.float32).at[:, :, 1, 1].add(jnp.eye(c, dtype=jnp.float32))
    w_banded = _banded_weights(w_eff, width, n_out)        # (3, (W+2)*C, n_out)
    bias_row = jnp.pad(jnp.tile(bias.astype(jnp.float32), width),
                       (0, n_out - wo)).reshape(1, n_out)
    return w_banded, bias_row


def resnet_forward(x_nchw, w_banded, bias_row):
    """out = Conv2d(C, C, 3, padding=1)(x) + bias + x, NCHW in / NCHW out."""
    B, C, H, W = x_nchw.shape
    Wp = (W + 2) * C                     # padded row width (matmul K)
    Wo = W * C                           # valid output row width
    No = w_banded.shape[-1]              # lane-dense output width (>=128)

    # NCHW -> NHWC once at the op boundary (PyTorch layout is mandatory here); then
    # zero-pad spatially and flatten (batch, padded-row) into ONE row axis.
    x_nhwc = jnp.transpose(x_nchw, (0, 2, 3, 1))                    # (B, H, W, C)
    xpad = jnp.pad(x_nhwc, ((0, 0), (1, 1), (1, 1), (0, 0)))        # (B, H+2, W+2, C)
    xrows = xpad.reshape(B * (H + 2), Wp)                           # (B*(H+2), Wp)

    m_valid = B * (H + 2)                # output rows incl. 2 discard rows per image
    TM, num_tiles = _choose_row_tiling(m_valid)
    m_total = TM * num_tiles

    # One extra zero row on top so output flat row q reads input rows q, q+1, q+2
    # (uniform shift across the whole flattened batch); tail zeros keep the last
    # tile's loads in bounds.
    xp = jnp.pad(xrows, ((1, m_total + 1 - m_valid), (0, 0)))       # (m_total+2, Wp)

    conv_macs = B * H * W * C * C * 9
    flops = 2 * conv_macs + 2 * B * H * W * C                       # + residual + bias
    bytes_accessed = 4 * ((m_total + 2) * Wp + 3 * Wp * No + No + m_total * No)

    out_flat = pl.pallas_call(
        _resnet_kernel,
        out_shape=jax.ShapeDtypeStruct((m_total, No), x_nchw.dtype),
        grid_spec=pl.GridSpec(
            grid=(num_tiles,),
            in_specs=[
                # Flattened padded rows: VMEM resident across all row tiles.
                pl.BlockSpec((m_total + 2, Wp), lambda i: (0, 0)),
                # Banded weights + bias: resident across the whole grid.
                pl.BlockSpec((3, Wp, No), lambda i: (0, 0, 0)),
                pl.BlockSpec((1, No), lambda i: (0, 0)),
            ],
            out_specs=pl.BlockSpec((TM, No), lambda i: (i, 0)),
        ),
        compiler_params=pltpu.CompilerParams(
            # Single parallel axis with >=2 steps -> v7x megacore can use both TCs;
            # extra step costs ~0.35us on v5e/v6e (negligible here).
            dimension_semantics=("parallel",),
            vmem_limit_bytes=32 * 1024 * 1024,
        ),
        cost_estimate=pl.CostEstimate(
            flops=flops, transcendentals=0, bytes_accessed=bytes_accessed),
    )(xp, w_banded, bias_row)

    # Drop the per-image padding rows and the zero lane padding, back to NCHW.
    out = out_flat[:m_valid].reshape(B, H + 2, No)[:, 1:H + 1, :Wo]
    out = out.reshape(B, H, W, C)
    return jnp.transpose(out, (0, 3, 1, 2))


if __name__ == "__main__":
    key = jax.random.PRNGKey(0)
    k_x, k_w, k_b = jax.random.split(key, 3)

    B, C, H, W = 2, 4, 16, 16
    x = jax.random.normal(k_x, (B, C, H, W), dtype=jnp.float32)
    # Deterministic synthetic Conv2d(C, C, 3, padding=1) parameters.
    fan_in = C * 3 * 3
    bound = 1.0 / (fan_in ** 0.5)
    weight = jax.random.uniform(k_w, (C, C, 3, 3), jnp.float32, -bound, bound)
    bias = jax.random.uniform(k_b, (C,), jnp.float32, -bound, bound)

    # Per-layer prep runs ONCE (banding, residual fold, bias tiling)...
    w_banded, bias_row = prepare_resnet_params(weight, bias, W)
    # ...and the jitted forward only does layout + the fused Pallas kernel.
    fwd = jax.jit(resnet_forward)
    out = fwd(x, w_banded, bias_row)
    jax.block_until_ready(out)

    # Reference: F.conv2d(x, weight, bias, padding=1) + x
    ref = jax.lax.conv_general_dilated(
        x, weight, window_strides=(1, 1), padding=((1, 1), (1, 1)),
        dimension_numbers=("NCHW", "OIHW", "NCHW"),
    ) + bias[None, :, None, None] + x
    assert jnp.allclose(out, ref, atol=1e-4, rtol=1e-4), "mismatch vs reference"

    print("KERNEL_OK")
</pallas_src>

<mosaic_0001>
module attributes {stable_mosaic.version = 11 : i64} {
  func.func @_resnet_kernel(%arg0: i32, %arg1: memref<50x72xf32, #tpu.memory_space<vmem>>, %arg2: memref<3x72x128xf32, #tpu.memory_space<vmem>>, %arg3: memref<1x128xf32, #tpu.memory_space<vmem>>, %arg4: memref<24x128xf32, #tpu.memory_space<vmem>>) attributes {dimension_semantics = [#tpu.dimension_semantics<parallel>], iteration_bounds = array<i64: 2>, scalar_prefetch = 0 : i64, scratch_operands = 0 : i64, tpu.core_type = #tpu.core_type<tc>, window_params = [{pipeline_mode = #tpu.pipeline_mode<synchronous>, transform_indices = @transform_0, window_bounds = array<i64: 50, 72>}, {pipeline_mode = #tpu.pipeline_mode<synchronous>, transform_indices = @transform_1, window_bounds = array<i64: 3, 72, 128>}, {pipeline_mode = #tpu.pipeline_mode<synchronous>, transform_indices = @transform_2, window_bounds = array<i64: 1, 128>}, {transform_indices = @transform_3, window_bounds = array<i64: 24, 128>}]} {
    %c24_i32 = arith.constant 24 : i32
    %0 = arith.muli %arg0, %c24_i32 : i32
    %1 = tpu.assume_multiple %0, 8 : i32
    %2 = arith.index_cast %1 : i32 to index
    %c0 = arith.constant 0 : index
    %3 = vector.load %arg1[%2, %c0] : memref<50x72xf32, #tpu.memory_space<vmem>>, vector<24x72xf32>
    %c0_0 = arith.constant 0 : index
    %c0_1 = arith.constant 0 : index
    %c0_2 = arith.constant 0 : index
    %4 = vector.load %arg2[%c0_0, %c0_1, %c0_2] : memref<3x72x128xf32, #tpu.memory_space<vmem>>, vector<1x72x128xf32>
    %5 = vector.shape_cast %4 : vector<1x72x128xf32> to vector<72x128xf32>
    %cst = arith.constant dense<0.000000e+00> : vector<24x128xf32>
    %6 = tpu.matmul %3, %5, %cst {dimension_numbers = #tpu.dot_dimension_numbers<[1], [0], [0], [1], [0, 0, 1, 1], [], []>} : vector<24x72xf32>, vector<72x128xf32>, vector<24x128xf32> -> vector<24x128xf32>
    %c1_i32 = arith.constant 1 : i32
    %7 = arith.addi %1, %c1_i32 : i32
    %8 = arith.index_cast %7 : i32 to index
    %c0_3 = arith.constant 0 : index
    %9 = vector.load %arg1[%8, %c0_3] : memref<50x72xf32, #tpu.memory_space<vmem>>, vector<24x72xf32>
    %c1 = arith.constant 1 : index
    %c0_4 = arith.constant 0 : index
    %c0_5 = arith.constant 0 : index
    %10 = vector.load %arg2[%c1, %c0_4, %c0_5] : memref<3x72x128xf32, #tpu.memory_space<vmem>>, vector<1x72x128xf32>
    %11 = vector.shape_cast %10 : vector<1x72x128xf32> to vector<72x128xf32>
    %cst_6 = arith.constant dense<0.000000e+00> : vector<24x128xf32>
    %12 = tpu.matmul %9, %11, %cst_6 {dimension_numbers = #tpu.dot_dimension_numbers<[1], [0], [0], [1], [0, 0, 1, 1], [], []>} : vector<24x72xf32>, vector<72x128xf32>, vector<24x128xf32> -> vector<24x128xf32>
    %13 = arith.addf %6, %12 : vector<24x128xf32>
    %c2_i32 = arith.constant 2 : i32
    %14 = arith.addi %1, %c2_i32 : i32
    %15 = arith.index_cast %14 : i32 to index
    %c0_7 = arith.constant 0 : index
    %16 = vector.load %arg1[%15, %c0_7] : memref<50x72xf32, #tpu.memory_space<vmem>>, vector<24x72xf32>
    %c2 = arith.constant 2 : index
    %c0_8 = arith.constant 0 : index
    %c0_9 = arith.constant 0 : index
    %17 = vector.load %arg2[%c2, %c0_8, %c0_9] : memref<3x72x128xf32, #tpu.memory_space<vmem>>, vector<1x72x128xf32>
    %18 = vector.shape_cast %17 : vector<1x72x128xf32> to vector<72x128xf32>
    %cst_10 = arith.constant dense<0.000000e+00> : vector<24x128xf32>
    %19 = tpu.matmul %16, %18, %cst_10 {dimension_numbers = #tpu.dot_dimension_numbers<[1], [0], [0], [1], [0, 0, 1, 1], [], []>} : vector<24x72xf32>, vector<72x128xf32>, vector<24x128xf32> -> vector<24x128xf32>
    %20 = arith.addf %13, %19 : vector<24x128xf32>
    %c0_11 = arith.constant 0 : index
    %c0_12 = arith.constant 0 : index
    %21 = vector.load %arg3[%c0_11, %c0_12] : memref<1x128xf32, #tpu.memory_space<vmem>>, vector<1x128xf32>
    %22 = vector.broadcast %21 : vector<1x128xf32> to vector<24x128xf32>
    %23 = arith.addf %20, %22 : vector<24x128xf32>
    %c0_13 = arith.constant 0 : index
    %c0_14 = arith.constant 0 : index
    %24 = vector.load %arg4[%c0_13, %c0_14] : memref<24x128xf32, #tpu.memory_space<vmem>>, vector<24x128xf32>
    tpu.vector_store %arg4[%c0_13, %c0_14], %23 {strides = array<i32>} : memref<24x128xf32, #tpu.memory_space<vmem>>, vector<24x128xf32>,
    return
  }
  func.func @transform_0(%arg0: i32) -> (i32, i32) {
    %c0_i32 = arith.constant 0 : i32
    %c0_i32_0 = arith.constant 0 : i32
    %c0_i32_1 = arith.constant 0 : i32
    return %c0_i32, %c0_i32_0 : i32, i32
  }
  func.func @transform_1(%arg0: i32) -> (i32, i32, i32) {
    %c0_i32 = arith.constant 0 : i32
    %c0_i32_0 = arith.constant 0 : i32
    %c0_i32_1 = arith.constant 0 : i32
    %c0_i32_2 = arith.constant 0 : i32
    return %c0_i32, %c0_i32_0, %c0_i32_1 : i32, i32, i32
  }
  func.func @transform_2(%arg0: i32) -> (i32, i32) {
    %c0_i32 = arith.constant 0 : i32
    %c0_i32_0 = arith.constant 0 : i32
    %c0_i32_1 = arith.constant 0 : i32
    return %c0_i32, %c0_i32_0 : i32, i32
  }
  func.func @transform_3(%arg0: i32) -> (i32, i32) {
    %c0_i32 = arith.constant 0 : i32
    %c0_i32_0 = arith.constant 0 : i32
    return %arg0, %c0_i32 : i32, i32
  }
}

</mosaic_0001>

<llo_original>
// kernel: resnet_forward.1
$region0: #{resnet_forward.1}
  #allocation0 [shape = 'u32[]', space=smem, size = 0x4, offset = 0x4, fixed_abs, tag = 'smem constant byte address 0x4 - core index']
  #allocation1 [shape = 'u32[144,128]{1,0:T(1,128)}', space=vmem, size = 0x12000, scoped, tag = 'internal scratch']
  %s0 = inlined_call_operand.vmem [shape: f32[50,72], index: 0, kind: input, shape index: {}]
  %s1 = inlined_call_operand.vmem [shape: f32[3,72,128], index: 1, kind: input, shape index: {}]
  %s2 = inlined_call_operand.vmem [shape: f32[1,128], index: 2, kind: input, shape index: {}]
  %s3 = inlined_call_operand.vmem [shape: f32[48,128], index: 3, kind: output, shape index: {}]
  %s4 = sld [smem:[#allocation0]]
  $region45: #{resnet_forward.1} parent=0
    _
  %s6 = ssub.s32 1, %s4
  %s7 = scalar_select 0, %s6, %s4
  loop: start=0, step=1, limit=4
  $region2: #{resnet_forward.1} parent=0 // loop_pre_header
    _
  $region3: #{resnet_forward.1} parent=0 // loop_header
    %s9 = sphi 0, %s13
    %p10 = scmp.ge.s32.totalorder %s9, 4
    %s17 = sphi 0, %s17
    %s19 = sphi 0, %s17
    %s20 = sphi 0, %s19
    %s34 = sphi 0, %s20
    %s38 = sphi 0, %s38
    %s40 = sphi 0, %s38
    %s41 = sphi 0, %s40
    %s55 = sphi 0, %s41
    %s59 = sphi 0, %s59
    %s61 = sphi 0, %s59
    %s62 = sphi 0, %s61
    %s76 = sphi 0, %s62
    %s82 = sphi 0, %s84
    %s85 = sphi 0, %s82
    %s86 = sphi 0, %s85
    %s102 = sphi 0, %s86
  $region4: #{resnet_forward.1} parent=0 // loop_header_branch
    %12 = sbr.rel (%p10) target = $region8
  $region5: #{resnet_forward.1} parent=0 // loop_body
    %s14 = ssub.s32 %s9, 1
    %s15 = ssub.s32 %s9, 2
    %s16 = sadd.s32 %s9, 1
    %s18 = sadd.s32 %s17, 1
    %p21 = scmp.eq.s32.totalorder %s9, 1
    %p22 = scmp.ne.s32.totalorder %s17, %s19
    %p23 = scmp.eq.s32.totalorder %s9, 0
    %p24 = por %p22, %p23
    %p25 = scmp.ne.s32.totalorder %s17, %s19
    %p26 = scmp.eq.s32.totalorder %s14, 1
    %p27 = por %p25, %p26
    %p28 = scmp.ne.s32.totalorder %s19, %s20
    %p29 = scmp.eq.s32.totalorder %s14, 0
    %p30 = por %p28, %p29
    %p31 = scmp.ne.s32.totalorder %s19, %s20
    %p32 = scmp.eq.s32.totalorder %s15, 1
    %p33 = por %p31, %p32
    %p35 = scmp.ne.s32.totalorder %s20, %s34
    %p36 = scmp.eq.s32.totalorder %s15, 0
    %p37 = por %p35, %p36
    %s39 = sadd.s32 %s38, 1
    %p42 = scmp.eq.s32.totalorder %s9, 1
    %p43 = scmp.ne.s32.totalorder %s38, %s40
    %p44 = scmp.eq.s32.totalorder %s9, 0
    %p45 = por %p43, %p44
    %p46 = scmp.ne.s32.totalorder %s38, %s40
    %p47 = scmp.eq.s32.totalorder %s14, 1
    %p48 = por %p46, %p47
    %p49 = scmp.ne.s32.totalorder %s40, %s41
    %p50 = scmp.eq.s32.totalorder %s14, 0
    %p51 = por %p49, %p50
    %p52 = scmp.ne.s32.totalorder %s40, %s41
    %p53 = scmp.eq.s32.totalorder %s15, 1
    %p54 = por %p52, %p53
    %p56 = scmp.ne.s32.totalorder %s41, %s55
    %p57 = scmp.eq.s32.totalorder %s15, 0
    %p58 = por %p56, %p57
    %s60 = sadd.s32 %s59, 1
    %p63 = scmp.eq.s32.totalorder %s9, 1
    %p64 = scmp.ne.s32.totalorder %s59, %s61
    %p65 = scmp.eq.s32.totalorder %s9, 0
    %p66 = por %p64, %p65
    %p67 = scmp.ne.s32.totalorder %s59, %s61
    %p68 = scmp.eq.s32.totalorder %s14, 1
    %p69 = por %p67, %p68
    %p70 = scmp.ne.s32.totalorder %s61, %s62
    %p71 = scmp.eq.s32.totalorder %s14, 0
    %p72 = por %p70, %p71
    %p73 = scmp.ne.s32.totalorder %s61, %s62
    %p74 = scmp.eq.s32.totalorder %s15, 1
    %p75 = por %p73, %p74
    %p77 = scmp.ne.s32.totalorder %s62, %s76
    %p78 = scmp.eq.s32.totalorder %s15, 0
    %p79 = por %p77, %p78
    %s80 = ssub.s32 %s9, %s16
    %p81 = scmp.eq.s32.totalorder %s80, 0
    %s83 = sadd.s32 %s82, 1
    %s84 = scalar_select %p81, %s82, %s83
    %p87 = pneg %p81
    %p88 = scmp.eq.s32.totalorder %s9, 1
    %p89 = por %p87, %p88
    %p90 = scmp.ne.s32.totalorder %s82, %s85
    %p91 = scmp.eq.s32.totalorder %s9, 0
    %p92 = por %p90, %p91
    %p93 = scmp.ne.s32.totalorder %s82, %s85
    %p94 = scmp.eq.s32.totalorder %s14, 1
    %p95 = por %p93, %p94
    %p96 = scmp.ne.s32.totalorder %s85, %s86
    %p97 = scmp.eq.s32.totalorder %s14, 0
    %p98 = por %p96, %p97
    %p99 = scmp.ne.s32.totalorder %s85, %s86
    %p100 = scmp.eq.s32.totalorder %s15, 1
    %p101 = por %p99, %p100
    %p103 = scmp.ne.s32.totalorder %s86, %s102
    %p104 = scmp.eq.s32.totalorder %s15, 0
    %p105 = por %p103, %p104
    %p106 = scmp.le.s32.totalorder 1, %s9
    %p107 = scmp.lt.s32.totalorder %s9, 3
    %p108 = pnand %p106, %p107
    %p109 = pneg %p108
    // Predicated region
    $region9: #{resnet_forward.1} parent=5 // pred_check
      _
    $region10: #{resnet_forward.1} parent=5 // pred_check_branch
      %111 = sbr.rel (%p108) target = $region12
    $region11: #{resnet_forward.1} parent=5 // pred_region
      %s112 = ssub.s32 %s9, 1
      // Predicated region
      $region13: #{resnet_forward.1} parent=11 // pred_check
        %p113 = pneg %p30
      $region14: #{resnet_forward.1} parent=11 // pred_check_branch
        %115 = sbr.rel (%p113) target = $region16
      $region15: #{resnet_forward.1} parent=11 // pred_region
        _
      $region16: #{resnet_forward.1} parent=11 // pred_fallthru
        _
      // Predicated region
      $region17: #{resnet_forward.1} parent=11 // pred_check
        %p116 = pneg %p51
      $region18: #{resnet_forward.1} parent=11 // pred_check_branch
        %118 = sbr.rel (%p116) target = $region20
      $region19: #{resnet_forward.1} parent=11 // pred_region
        _
      $region20: #{resnet_forward.1} parent=11 // pred_fallthru
        _
      // Predicated region
      $region21: #{resnet_forward.1} parent=11 // pred_check
        %p119 = pneg %p72
      $region22: #{resnet_forward.1} parent=11 // pred_check_branch
        %121 = sbr.rel (%p119) target = $region24
      $region23: #{resnet_forward.1} parent=11 // pred_region
        _
      $region24: #{resnet_forward.1} parent=11 // pred_fallthru
        _
    $region12: #{resnet_forward.1} parent=5 // pred_fallthru
      _
    %p122 = scmp.lt.s32.totalorder %s9, 2
    // Predicated region
    $region25: #{resnet_forward.1} parent=5 // pred_check
      %p123 = pneg %p122
    $region26: #{resnet_forward.1} parent=5 // pred_check_branch
      %125 = sbr.rel (%p123) target = $region28
    $region27: #{resnet_forward.1} parent=5 // pred_region
      _
    $region28: #{resnet_forward.1} parent=5 // pred_fallthru
      _
    %p126 = scmp.le.s32.totalorder 1, %s9
    %p127 = scmp.lt.s32.totalorder %s9, 3
    %p128 = pnand %p126, %p127
    %p129 = pneg %p128
    // Predicated region
    $region29: #{resnet_forward.1} parent=5 // pred_check
      _
    $region30: #{resnet_forward.1} parent=5 // pred_check_branch
      %131 = sbr.rel (%p128) target = $region32
    $region31: #{resnet_forward.1} parent=5 // pred_region
      %s132 = ssub.s32 %s9, 1
      %p133 = pneg %p30
      %p134 = pneg %p27
      %p135 = pneg %p51
      %p136 = pneg %p48
      %p137 = pneg %p72
      %p138 = pneg %p69
      %p139 = pneg %p98
      %p140 = pneg %p95
      %s141 = smul.u32 3, %s14
      %p142 = scmp.lt.s32.totalorder %s141, 5
      %s143 = scalar_select %p142, %s141, 5
      %s144 = smul.addr %s143, 8
      %s145 = scalar_lea.vmem %s3, %s144
      %s146 = smul.u32 3, %s14
      %p147 = scmp.lt.s32.totalorder %s146, 5
      %s148 = scalar_select %p147, %s146, 5
      %s149 = smul.addr %s148, 8
      %s150 = scalar_lea.vmem %s3, %s149
      %s151 = smul.u32 3, %s14
      %s152 = smul.u32 %s14, 24
      %s153 = scalar_lea.vmem %s0, %s152
      %v154 = vld [vmem:[%s153] sm:$0xff]
      %v155 = vld [vmem:[%s153 + $0x8] sm:$0xff]
      %v156 = vld [vmem:[%s153 + $0x10] sm:$0xff]
      %v157 = vld [vmem:[%s1] sm:$0xff]
      %v158 = vld [vmem:[%s1 + $0x8] sm:$0xff]
      %v159 = vld [vmem:[%s1 + $0x10] sm:$0xff]
      %v160 = vld [vmem:[%s1 + $0x18] sm:$0xff]
      %v161 = vld [vmem:[%s1 + $0x20] sm:$0xff]
      %v162 = vld [vmem:[%s1 + $0x28] sm:$0xff]
      %v163 = vld [vmem:[%s1 + $0x30] sm:$0xff]
      %v164 = vld [vmem:[%s1 + $0x38] sm:$0xff]
      %v165 = vld [vmem:[%s1 + $0x40] sm:$0xff]
      %s166 = sadd.s32 %s152, 1
      %s167 = scalar_lea.vmem %s0, %s166
      %v168 = vld [vmem:[%s167] sm:$0xff]
      %v169 = vld [vmem:[%s167 + $0x8] sm:$0xff]
      %v170 = vld [vmem:[%s167 + $0x10] sm:$0xff]
      %s171 = scalar_lea.vmem %s1, 72
      %v172 = vld [vmem:[%s171] sm:$0xff]
      %v173 = vld [vmem:[%s171 + $0x8] sm:$0xff]
      %v174 = vld [vmem:[%s171 + $0x10] sm:$0xff]
      %v175 = vld [vmem:[%s171 + $0x18] sm:$0xff]
      %v176 = vld [vmem:[%s171 + $0x20] sm:$0xff]
      %v177 = vld [vmem:[%s171 + $0x28] sm:$0xff]
      %v178 = vld [vmem:[%s171 + $0x30] sm:$0xff]
      %v179 = vld [vmem:[%s171 + $0x38] sm:$0xff]
      %v180 = vld [vmem:[%s171 + $0x40] sm:$0xff]
      %vm181 = vcmask 588800
      %v183 = vsel %vm181, %v168, 0
      %v186 = vsel %vm181, %v169, 0
      %v189 = vsel %vm181, %v170, 0
      %191 = vmatprep.subr.mxu0 0.0
      %192 = vmatpush1.msra.mxu0 0.0
      %193 = vmatprep.subr.mxu0 0.0
      %194 = vmatpush1.msra.mxu0 0.0
      %195 = vmatprep.subr.mxu0 0.0
      %196 = vmatpush1.msra.mxu0 0.0
      %197 = vmatprep.subr.mxu0 0.0
      %198 = vmatpush1.msra.mxu0 0.0
      %199 = vmatprep.subr.mxu0 0.0
      %200 = vmatpush1.msra.mxu0 0.0
      %201 = vmatprep.subr.mxu0 0.0
      %202 = vmatpush1.msra.mxu0 0.0
      %203 = vmatprep.subr.mxu0 0.0
      %204 = vmatpush1.msra.mxu0 0.0
      %205 = vmatprep.subr.mxu0 0.0
      %206 = vmatpush1.msra.mxu0 %v180
      %207 = vmatprep.subr.mxu0 0.0
      %208 = vmatpush1.msra.mxu0 %v179
      %209 = vmatprep.subr.mxu0 0.0
      %210 = vmatpush1.msra.mxu0 %v178
      %211 = vmatprep.subr.mxu0 0.0
      %212 = vmatpush1.msra.mxu0 %v177
      %213 = vmatprep.subr.mxu0 0.0
      %214 = vmatpush1.msra.mxu0 %v176
      %215 = vmatprep.subr.mxu0 0.0
      %216 = vmatpush1.msra.mxu0 %v175
      %217 = vmatprep.subr.mxu0 0.0
      %218 = vmatpush1.msra.mxu0 %v174
      %219 = vmatprep.subr.mxu0 0.0
      %220 = vmatpush1.msra.mxu0 %v173
      %221 = vmatprep.subr.mxu0 0.0
      %222 = vmatpush1.msra.mxu0 %v172
      %223 = vmatprep.subr.mxu0 0.0
      %224 = vmatpush2.msra.mxu0 0.0
      %225 = vmatprep.subr.mxu0 0.0
      %226 = vmatpush2.msra.mxu0 0.0
      %227 = vmatprep.subr.mxu0 0.0
      %228 = vmatpush2.msra.mxu0 0.0
      %229 = vmatprep.subr.mxu0 0.0
      %230 = vmatpush2.msra.mxu0 0.0
      %231 = vmatprep.subr.mxu0 0.0
      %232 = vmatpush2.msra.mxu0 0.0
      %233 = vmatprep.subr.mxu0 0.0
      %234 = vmatpush2.msra.mxu0 0.0
      %235 = vmatprep.subr.mxu0 0.0
      %236 = vmatpush2.msra.mxu0 0.0
      %237 = vmatprep.subr.mxu0 0.0
      %238 = vmatpush2.msra.mxu0 0.0
      %239 = vmatprep.subr.mxu0 0.0
      %240 = vmatpush2.msra.mxu0 0.0
      %241 = vmatprep.subr.mxu0 0.0
      %242 = vmatpush2.msra.mxu0 0.0
      %243 = vmatprep.subr.mxu0 0.0
      %244 = vmatpush2.msra.mxu0 0.0
      %245 = vmatprep.subr.mxu0 0.0
      %246 = vmatpush2.msra.mxu0 0.0
      %247 = vmatprep.subr.mxu0 0.0
      %248 = vmatpush2.msra.mxu0 0.0
      %249 = vmatprep.subr.mxu0 0.0
      %250 = vmatpush2.msra.mxu0 0.0
      %251 = vmatprep.subr.mxu0 0.0
      %252 = vmatpush2.msra.mxu0 0.0
      %253 = vmatprep.subr.mxu0 0.0
      %254 = vmatpush2.msra.mxu0 0.0
      %255 = vmatprep.mubr.f32.mxu0 0.0
      %256 = vmatmul.mubr.f32.gmra.mxu0 %v183
      %v257 = vpop.f32.mrf.mxu0
      %v258 = vadd.f32 0.0, %v257
      %v259 = vpop.f32.mrf.mxu0
      %260 = vmatprep.mubr.f32.mxu0 0.0
      %261 = vmatmul.mubr.f32.gmra.mxu0 %v186
      %v262 = vpop.f32.mrf.mxu0
      %v263 = vadd.f32 0.0, %v262
      %v264 = vpop.f32.mrf.mxu0
      %265 = vmatprep.mubr.f32.mxu0 0.0
      %266 = vmatmul.mubr.f32.gmra.mxu0 %v189
      %v267 = vpop.f32.mrf.mxu0
      %v268 = vadd.f32 0.0, %v267
      %v269 = vpop.f32.mrf.mxu0
      %270 = vdwg.mxu0
      %v272 = vsel %vm181, %v154, 0
      %v275 = vsel %vm181, %v155, 0
      %v278 = vsel %vm181, %v156, 0
      %280 = vmatprep.subr.mxu0 0.0
      %281 = vmatpush1.msra.mxu0 0.0
      %282 = vmatprep.subr.mxu0 0.0
      %283 = vmatpush1.msra.mxu0 0.0
      %284 = vmatprep.subr.mxu0 0.0
      %285 = vmatpush1.msra.mxu0 0.0
      %286 = vmatprep.subr.mxu0 0.0
      %287 = vmatpush1.msra.mxu0 0.0
      %288 = vmatprep.subr.mxu0 0.0
      %289 = vmatpush1.msra.mxu0 0.0
      %290 = vmatprep.subr.mxu0 0.0
      %291 = vmatpush1.msra.mxu0 0.0
      %292 = vmatprep.subr.mxu0 0.0
      %293 = vmatpush1.msra.mxu0 0.0
      %294 = vmatprep.subr.mxu0 0.0
      %295 = vmatpush1.msra.mxu0 %v165
      %296 = vmatprep.subr.mxu0 0.0
      %297 = vmatpush1.msra.mxu0 %v164
      %298 = vmatprep.subr.mxu0 0.0
      %299 = vmatpush1.msra.mxu0 %v163
      %300 = vmatprep.subr.mxu0 0.0
      %301 = vmatpush1.msra.mxu0 %v162
      %302 = vmatprep.subr.mxu0 0.0
      %303 = vmatpush1.msra.mxu0 %v161
      %304 = vmatprep.subr.mxu0 0.0
      %305 = vmatpush1.msra.mxu0 %v160
      %306 = vmatprep.subr.mxu0 0.0
      %307 = vmatpush1.msra.mxu0 %v159
      %308 = vmatprep.subr.mxu0 0.0
      %309 = vmatpush1.msra.mxu0 %v158
      %310 = vmatprep.subr.mxu0 0.0
      %311 = vmatpush1.msra.mxu0 %v157
      %312 = vmatprep.subr.mxu0 0.0
      %313 = vmatpush2.msra.mxu0 0.0
      %314 = vmatprep.subr.mxu0 0.0
      %315 = vmatpush2.msra.mxu0 0.0
      %316 = vmatprep.subr.mxu0 0.0
      %317 = vmatpush2.msra.mxu0 0.0
      %318 = vmatprep.subr.mxu0 0.0
      %319 = vmatpush2.msra.mxu0 0.0
      %320 = vmatprep.subr.mxu0 0.0
      %321 = vmatpush2.msra.mxu0 0.0
      %322 = vmatprep.subr.mxu0 0.0
      %323 = vmatpush2.msra.mxu0 0.0
      %324 = vmatprep.subr.mxu0 0.0
      %325 = vmatpush2.msra.mxu0 0.0
      %326 = vmatprep.subr.mxu0 0.0
      %327 = vmatpush2.msra.mxu0 0.0
      %328 = vmatprep.subr.mxu0 0.0
      %329 = vmatpush2.msra.mxu0 0.0
      %330 = vmatprep.subr.mxu0 0.0
      %331 = vmatpush2.msra.mxu0 0.0
      %332 = vmatprep.subr.mxu0 0.0
      %333 = vmatpush2.msra.mxu0 0.0
      %334 = vmatprep.subr.mxu0 0.0
      %335 = vmatpush2.msra.mxu0 0.0
      %336 = vmatprep.subr.mxu0 0.0
      %337 = vmatpush2.msra.mxu0 0.0
      %338 = vmatprep.subr.mxu0 0.0
      %339 = vmatpush2.msra.mxu0 0.0
      %340 = vmatprep.subr.mxu0 0.0
      %341 = vmatpush2.msra.mxu0 0.0
      %342 = vmatprep.subr.mxu0 0.0
      %343 = vmatpush2.msra.mxu0 0.0
      %344 = vmatprep.mubr.f32.mxu0 0.0
      %345 = vmatmul.mubr.f32.gmra.mxu0 %v272
      %v346 = vpop.f32.mrf.mxu0
      %v347 = vadd.f32 %v258, %v346
      %v348 = vpop.f32.mrf.mxu0
      %349 = vmatprep.mubr.f32.mxu0 0.0
      %350 = vmatmul.mubr.f32.gmra.mxu0 %v275
      %v351 = vpop.f32.mrf.mxu0
      %v352 = vadd.f32 %v263, %v351
      %v353 = vpop.f32.mrf.mxu0
      %354 = vmatprep.mubr.f32.mxu0 0.0
      %355 = vmatmul.mubr.f32.gmra.mxu0 %v278
      %v356 = vpop.f32.mrf.mxu0
      %v357 = vadd.f32 %v268, %v356
      %v358 = vpop.f32.mrf.mxu0
      %359 = vdwg.mxu0
      %s360 = sadd.s32 %s152, 2
      %s361 = scalar_lea.vmem %s0, %s360
      %v362 = vld [vmem:[%s361] sm:$0xff]
      %v363 = vld [vmem:[%s361 + $0x8] sm:$0xff]
      %v364 = vld [vmem:[%s361 + $0x10] sm:$0xff]
      %s365 = scalar_lea.vmem %s1, 144
      %v366 = vld [vmem:[%s365] sm:$0xff]
      %v367 = vld [vmem:[%s365 + $0x8] sm:$0xff]
      %v368 = vld [vmem:[%s365 + $0x10] sm:$0xff]
      %v369 = vld [vmem:[%s365 + $0x18] sm:$0xff]
      %v370 = vld [vmem:[%s365 + $0x20] sm:$0xff]
      %v371 = vld [vmem:[%s365 + $0x28] sm:$0xff]
      %v372 = vld [vmem:[%s365 + $0x30] sm:$0xff]
      %v373 = vld [vmem:[%s365 + $0x38] sm:$0xff]
      %v374 = vld [vmem:[%s365 + $0x40] sm:$0xff]
      %v376 = vsel %vm181, %v362, 0
      %v379 = vsel %vm181, %v363, 0
      %v382 = vsel %vm181, %v364, 0
      %384 = vmatprep.subr.mxu0 0.0
      %385 = vmatpush1.msra.mxu0 0.0
      %386 = vmatprep.subr.mxu0 0.0
      %387 = vmatpush1.msra.mxu0 0.0
      %388 = vmatprep.subr.mxu0 0.0
      %389 = vmatpush1.msra.mxu0 0.0
      %390 = vmatprep.subr.mxu0 0.0
      %391 = vmatpush1.msra.mxu0 0.0
      %392 = vmatprep.subr.mxu0 0.0
      %393 = vmatpush1.msra.mxu0 0.0
      %394 = vmatprep.subr.mxu0 0.0
      %395 = vmatpush1.msra.mxu0 0.0
      %396 = vmatprep.subr.mxu0 0.0
      %397 = vmatpush1.msra.mxu0 0.0
      %398 = vmatprep.subr.mxu0 0.0
      %399 = vmatpush1.msra.mxu0 %v374
      %400 = vmatprep.subr.mxu0 0.0
      %401 = vmatpush1.msra.mxu0 %v373
      %402 = vmatprep.subr.mxu0 0.0
      %403 = vmatpush1.msra.mxu0 %v372
      %404 = vmatprep.subr.mxu0 0.0
      %405 = vmatpush1.msra.mxu0 %v371
      %406 = vmatprep.subr.mxu0 0.0
      %407 = vmatpush1.msra.mxu0 %v370
      %408 = vmatprep.subr.mxu0 0.0
      %409 = vmatpush1.msra.mxu0 %v369
      %410 = vmatprep.subr.mxu0 0.0
      %411 = vmatpush1.msra.mxu0 %v368
      %412 = vmatprep.subr.mxu0 0.0
      %413 = vmatpush1.msra.mxu0 %v367
      %414 = vmatprep.subr.mxu0 0.0
      %415 = vmatpush1.msra.mxu0 %v366
      %416 = vmatprep.subr.mxu0 0.0
      %417 = vmatpush2.msra.mxu0 0.0
      %418 = vmatprep.subr.mxu0 0.0
      %419 = vmatpush2.msra.mxu0 0.0
      %420 = vmatprep.subr.mxu0 0.0
      %421 = vmatpush2.msra.mxu0 0.0
      %422 = vmatprep.subr.mxu0 0.0
      %423 = vmatpush2.msra.mxu0 0.0
      %424 = vmatprep.subr.mxu0 0.0
      %425 = vmatpush2.msra.mxu0 0.0
      %426 = vmatprep.subr.mxu0 0.0
      %427 = vmatpush2.msra.mxu0 0.0
      %428 = vmatprep.subr.mxu0 0.0
      %429 = vmatpush2.msra.mxu0 0.0
      %430 = vmatprep.subr.mxu0 0.0
      %431 = vmatpush2.msra.mxu0 0.0
      %432 = vmatprep.subr.mxu0 0.0
      %433 = vmatpush2.msra.mxu0 0.0
      %434 = vmatprep.subr.mxu0 0.0
      %435 = vmatpush2.msra.mxu0 0.0
      %436 = vmatprep.subr.mxu0 0.0
      %437 = vmatpush2.msra.mxu0 0.0
      %438 = vmatprep.subr.mxu0 0.0
      %439 = vmatpush2.msra.mxu0 0.0
      %440 = vmatprep.subr.mxu0 0.0
      %441 = vmatpush2.msra.mxu0 0.0
      %442 = vmatprep.subr.mxu0 0.0
      %443 = vmatpush2.msra.mxu0 0.0
      %444 = vmatprep.subr.mxu0 0.0
      %445 = vmatpush2.msra.mxu0 0.0
      %446 = vmatprep.subr.mxu0 0.0
      %447 = vmatpush2.msra.mxu0 0.0
      %448 = vmatprep.mubr.f32.mxu0 0.0
      %449 = vmatmul.mubr.f32.gmra.mxu0 %v376
      %v450 = vpop.f32.mrf.mxu0
      %v451 = vadd.f32 0.0, %v450
      %v452 = vpop.f32.mrf.mxu0
      %453 = vmatprep.mubr.f32.mxu0 0.0
      %454 = vmatmul.mubr.f32.gmra.mxu0 %v379
      %v455 = vpop.f32.mrf.mxu0
      %v456 = vadd.f32 0.0, %v455
      %v457 = vpop.f32.mrf.mxu0
      %458 = vmatprep.mubr.f32.mxu0 0.0
      %459 = vmatmul.mubr.f32.gmra.mxu0 %v382
      %v460 = vpop.f32.mrf.mxu0
      %v461 = vadd.f32 0.0, %v460
      %v462 = vpop.f32.mrf.mxu0
      %463 = vdwg.mxu0
      %v464 = vadd.f32 %v347, %v451
      %v465 = vadd.f32 %v352, %v456
      %v466 = vadd.f32 %v357, %v461
      %v467 = vld [vmem:[%s2] sm:$0x1]
      %v469 = vlaneseq
      %v470 = vshrl.u32 %v469, 7
      %v471 = vsub.s32 0, %v470
      %v472 = vrot.slane %v467, %v471
      %v474 = vadd.f32 %v464, %v472
      %v475 = vadd.f32 %v465, %v472
      %v476 = vadd.f32 %v466, %v472
      %477 = vst [vmem:[%s150] sm:$0xff] %v474
      %478 = vst [vmem:[%s150 + $0x8] sm:$0xff] %v475
      %479 = vst [vmem:[%s150 + $0x10] sm:$0xff] %v476
      %s480 = smul.u32 3, %s14
      %p481 = scmp.lt.s32.totalorder %s480, 5
      %s482 = scalar_select %p481, %s480, 5
      %s483 = smul.addr %s482, 8
      %s484 = scalar_lea.vmem %s3, %s483
      // Predicated region
      $region33: #{resnet_forward.1} parent=31 // pred_check
        %p485 = pneg %p95
      $region34: #{resnet_forward.1} parent=31 // pred_check_branch
        %487 = sbr.rel (%p485) target = $region36
      $region35: #{resnet_forward.1} parent=31 // pred_region
        %s488 = smul.u32 3, %s14
      $region36: #{resnet_forward.1} parent=31 // pred_fallthru
        _
    $region32: #{resnet_forward.1} parent=5 // pred_fallthru
      _
    %p489 = scmp.le.s32.totalorder 2, %s9
    // Predicated region
    $region37: #{resnet_forward.1} parent=5 // pred_check
      %p490 = pneg %p489
    $region38: #{resnet_forward.1} parent=5 // pred_check_branch
      %492 = sbr.rel (%p490) target = $region40
    $region39: #{resnet_forward.1} parent=5 // pred_region
      %s493 = ssub.s32 %s9, 2
      // Predicated region
      $region41: #{resnet_forward.1} parent=39 // pred_check
        %p494 = pneg %p101
      $region42: #{resnet_forward.1} parent=39 // pred_check_branch
        %496 = sbr.rel (%p494) target = $region44
      $region43: #{resnet_forward.1} parent=39 // pred_region
        %s497 = smul.u32 3, %s15
        %p498 = scmp.lt.s32.totalorder %s497, 5
        %s499 = scalar_select %p498, %s497, 5
        %s500 = smul.addr %s499, 8
        %s501 = scalar_lea.vmem %s3, %s500
      $region44: #{resnet_forward.1} parent=39 // pred_fallthru
        _
    $region40: #{resnet_forward.1} parent=5 // pred_fallthru
      _
  $region6: #{resnet_forward.1} parent=0 // loop_footer
    %s13 = sadd.s32 1, %s9
  $region7: #{resnet_forward.1} parent=0 // loop_footer_branch
    %8 = sbr.rel target = $region3
  $region8: #{resnet_forward.1} parent=0 // loop_exit
    _

</llo_original>
